<compile_context>
chip_gen: v6e
topology: v6e:2x2x1
jax: 0.10.0
libtpu: 0.0.40
codegen_flags: <defaults>
</compile_context>

<pallas_src>
import functools

import jax
import jax.numpy as jnp
from jax.experimental import pallas as pl
from jax.experimental.pallas import tpu as pltpu


def _round_up(n, m):
    return ((n + m - 1) // m) * m


def _sublane(dtype):
    # native sublane multiple: 8 for 32-bit, 16 for bf16, 32 for 8-bit
    return max(8, 32 // jnp.dtype(dtype).itemsize)


def _tile_bytes(shape, dtype):
    """VMEM footprint of a 2-D array including (sublane, 128) layout padding."""
    r, c = shape
    itemsize = jnp.dtype(dtype).itemsize
    rp = _round_up(max(int(r), 1), _sublane(dtype))
    cp = _round_up(max(int(c), 1), 128)
    return rp * cp * itemsize


def _vmem_capacity_bytes():
    try:
        info = pltpu.get_tpu_info()
        cap = getattr(info, "vmem_capacity_bytes", None)
        if cap:
            return int(cap)
    except Exception:
        pass
    return 64 << 20  # conservative fallback (v7x per-core VMEM)


# ---------------------------------------------------------------------------
# Pallas kernel
#   grid = (K, nt_rows, nt_cols);  k = hop, i = output row tile, c = column tile
#   ping/pong: VMEM hop-state [n_pad, H]; hop k reads scratch[k%2], writes [(k+1)%2]
#   acc:       per-row-tile f32 accumulator over the contraction (column) tiles
#   pooled:    (B, H) f32 accumulator for the fused softmax + global_add_pool
# ---------------------------------------------------------------------------
def _rgnn_kernel(tm, tk, s_is_full,
                 s_ref, x0_ref, bc_ref, p_ref, wf_ref, bf_ref,
                 out_ref,
                 ping_ref, pong_ref, acc_ref, pooled_ref):
    k = pl.program_id(0)
    i = pl.program_id(1)
    c = pl.program_id(2)
    nr = pl.num_programs(1)
    ncols = pl.num_programs(2)
    last_hop = k == pl.num_programs(0) - 1
    last_col = c == ncols - 1

    row0 = pl.multiple_of(i * tm, tm)
    col0 = pl.multiple_of(c * tk, tk)

    # --- one-time init at the very first grid step ---------------------------
    @pl.when((k == 0) & (i == 0) & (c == 0))
    def _seed():
        ping_ref[...] = x0_ref[...]          # x0 = x @ Wc, computed in the wrapper
        pooled_ref[...] = jnp.zeros_like(pooled_ref)

    # --- zero the per-row-tile accumulator at the first column step ----------
    @pl.when(c == 0)
    def _zero_acc():
        acc_ref[...] = jnp.zeros_like(acc_ref)

    # --- S tile ---------------------------------------------------------------
    if s_is_full:
        # Resident S: one (n_pad, n_pad) block (constant index_map -> DMA'd once);
        # nt_cols == 1 in this mode, so only the rows need slicing.
        s_tile = s_ref[pl.ds(row0, tm), :]
    else:
        s_tile = s_ref[...]                  # streamed (tm, n_pad) or (tm, tk) block

    def _accumulate(src_ref):
        acc_ref[...] += jnp.dot(s_tile, src_ref[pl.ds(col0, tk), :],
                                preferred_element_type=jnp.float32)

    # hop k reads scratch[k % 2]  (ping on even hops, pong on odd hops)
    @pl.when(k % 2 == 0)
    def _():
        _accumulate(ping_ref)

    @pl.when(k % 2 == 1)
    def _():
        _accumulate(pong_ref)

    not_last_hop = jnp.logical_not(last_hop)

    # --- commit hop state (hops 0..K-2) on the last column step ---------------
    @pl.when(last_col & not_last_hop & (k % 2 == 0))
    def _():
        pong_ref[pl.ds(row0, tm), :] = acc_ref[...].astype(pong_ref.dtype)

    @pl.when(last_col & not_last_hop & (k % 2 == 1))
    def _():
        ping_ref[pl.ds(row0, tm), :] = acc_ref[...].astype(ping_ref.dtype)

    # --- last hop: fused bias + feature softmax + global_add_pool per row tile
    # (padded rows give softmax(bc), but their P columns are zero, so they do not
    #  contribute to the pooled sum -- the padding invariant is preserved.)
    @pl.when(last_col & last_hop)
    def _():
        h = acc_ref[...] + bc_ref[...]
        h = h - jnp.max(h, axis=-1, keepdims=True)
        e = jnp.exp(h)
        hsm = e / jnp.sum(e, axis=-1, keepdims=True)
        # F.dropout(training=False) -> identity.
        pooled_ref[...] += jnp.dot(p_ref[...], hsm,
                                   preferred_element_type=jnp.float32)

    # --- final grid step: fc + softmax on the pooled (B, H) accumulator -------
    @pl.when(last_hop & last_col & (i == nr - 1))
    def _():
        logits = jnp.dot(pooled_ref[...], wf_ref[...],
                         preferred_element_type=jnp.float32) + bf_ref[...]
        logits = logits - jnp.max(logits, axis=-1, keepdims=True)
        e2 = jnp.exp(logits)
        out_ref[...] = (e2 / jnp.sum(e2, axis=-1, keepdims=True)).astype(out_ref.dtype)


def rgnn_pallas(S, x, Wc, bc, P, Wf, bf, *, K, tile_m=512,
                prop_dtype=jnp.bfloat16, force_mode=None):
    """S: [N, N] dense normalized adjacency, x: [N, F_in], P: [B, N] pooling one-hot."""
    assert K >= 1, "SGConv propagation expects K >= 1"
    N = S.shape[0]
    B = P.shape[0]
    H = Wc.shape[1]
    C = Wf.shape[1]

    subl = _sublane(prop_dtype)
    tile_m = max(_round_up(tile_m, 128), 128)

    # Pad node count.  Padded S rows/cols, x0 rows and P columns are zero, so the
    # result is unchanged.
    if _round_up(N, subl) <= tile_m:
        n_pad = max(_round_up(N, subl), subl)
        tm = n_pad
    else:
        tm = tile_m
        n_pad = _round_up(N, tm)
    nt_rows = n_pad // tm

    # --- generation-aware, lane-padding-aware VMEM budget ---------------------
    cap = _vmem_capacity_bytes()
    fixed = (
        2 * _tile_bytes((n_pad, H), prop_dtype)      # x0 input (double-buffered)
        + 2 * _tile_bytes((n_pad, H), prop_dtype)    # ping/pong hop-state scratch
        + _tile_bytes((tm, H), jnp.float32)          # per-row-tile accumulator
        + _tile_bytes((B, H), jnp.float32)           # pooled accumulator
        + 2 * _tile_bytes((B, tm), jnp.float32)      # P row tiles (double-buffered)
        + 2 * (_tile_bytes((1, H), jnp.float32) + _tile_bytes((H, C), jnp.float32)
               + _tile_bytes((1, C), jnp.float32) + _tile_bytes((B, C), jnp.float32))
        + (2 << 20)                                  # Mosaic internal scratch headroom
    )

    if force_mode is None:
        if 2 * _tile_bytes((n_pad, n_pad), prop_dtype) + fixed <= int(0.70 * cap):
            mode = "resident"      # S DMA'd once, kept in VMEM across all K hops
        elif 2 * _tile_bytes((tm, n_pad), prop_dtype) + fixed <= int(0.80 * cap):
            mode = "stream"        # full-width row tiles, re-streamed each hop
        else:
            mode = "tiled"         # column-tiled: VMEM use independent of N (v7x)
    else:
        mode = force_mode

    if mode == "resident":
        tk, nt_cols, s_is_full, s_fetches = n_pad, 1, True, 1
        s_spec = pl.BlockSpec((n_pad, n_pad), lambda k, i, c: (0, 0))
        s_bytes = 2 * _tile_bytes((n_pad, n_pad), prop_dtype)
    elif mode == "stream":
        tk, nt_cols, s_is_full, s_fetches = n_pad, 1, False, K
        s_spec = pl.BlockSpec((tm, n_pad), lambda k, i, c: (i, 0))
        s_bytes = 2 * _tile_bytes((tm, n_pad), prop_dtype)
    else:  # "tiled"
        tk, nt_cols, s_is_full, s_fetches = tm, n_pad // tm, False, K
        s_spec = pl.BlockSpec((tm, tk), lambda k, i, c: (i, c))
        s_bytes = 2 * _tile_bytes((tm, tk), prop_dtype)
        # TODO(synk): sweep pipeline_mode=pl.Buffered(3) on the S spec for v7x.

    need = fixed + s_bytes
    vmem_limit = int(min(max(need + (8 << 20), 32 << 20), int(0.95 * cap)))

    # --- host-side prep: x0 = x @ Wc hoisted out of the kernel -----------------
    x0 = jnp.dot(x.astype(jnp.float32), Wc.astype(jnp.float32))
    x0_p = jnp.zeros((n_pad, H), prop_dtype).at[:N, :].set(x0.astype(prop_dtype))
    S_p = jnp.zeros((n_pad, n_pad), prop_dtype).at[:N, :N].set(S.astype(prop_dtype))
    P_p = jnp.zeros((B, n_pad), jnp.float32).at[:, :N].set(P.astype(jnp.float32))
    bc_p = bc.reshape(1, H).astype(jnp.float32)
    Wf_p = Wf.astype(jnp.float32)
    bf_p = bf.reshape(1, C).astype(jnp.float32)

    prop_bytes = jnp.dtype(prop_dtype).itemsize
    flops = (2 * K * n_pad * n_pad * H       # K propagation hops
             + 2 * B * n_pad * H             # fused pooling matmul
             + 2 * B * H * C)                # fc
    bytes_accessed = (s_fetches * n_pad * n_pad * prop_bytes
                      + n_pad * H * prop_bytes
                      + K * B * n_pad * 4
                      + (H + H * C + C + B * C) * 4)
    transcendentals = n_pad * H + B * C

    grid_spec = pltpu.PrefetchScalarGridSpec(
        num_scalar_prefetch=0,
        grid=(K, nt_rows, nt_cols),
        in_specs=[
            s_spec,                                              # S (mode-dependent)
            pl.BlockSpec((n_pad, H), lambda k, i, c: (0, 0)),    # x0 (resident)
            pl.BlockSpec((1, H), lambda k, i, c: (0, 0)),        # bc
            pl.BlockSpec((B, tm), lambda k, i, c: (0, i)),       # P row tiles
            pl.BlockSpec((H, C), lambda k, i, c: (0, 0)),        # Wf
            pl.BlockSpec((1, C), lambda k, i, c: (0, 0)),        # bf
        ],
        out_specs=pl.BlockSpec((B, C), lambda k, i, c: (0, 0)),
        scratch_shapes=[
            pltpu.VMEM((n_pad, H), prop_dtype),    # ping (hop state)
            pltpu.VMEM((n_pad, H), prop_dtype),    # pong (hop state)
            pltpu.VMEM((tm, H), jnp.float32),      # per-row-tile f32 accumulator
            pltpu.VMEM((B, H), jnp.float32),       # pooled (B, H) accumulator
        ],
    )

    return pl.pallas_call(
        functools.partial(_rgnn_kernel, tm, tk, s_is_full),
        out_shape=jax.ShapeDtypeStruct((B, C), jnp.float32),
        grid_spec=grid_spec,
        compiler_params=pltpu.CompilerParams(
            # Hop state is per-core VMEM scratch carried across grid steps, so all
            # axes must stay "arbitrary" (no megacore split of row tiles).
            dimension_semantics=("arbitrary", "arbitrary", "arbitrary"),
            vmem_limit_bytes=vmem_limit,
        ),
        cost_estimate=pl.CostEstimate(
            flops=int(flops),
            transcendentals=int(transcendentals),
            bytes_accessed=int(bytes_accessed),
        ),
    )(S_p, x0_p, bc_p, P_p, Wf_p, bf_p)


# ---------------------------------------------------------------------------
# Plain-JAX glue: gcn_norm (as used by PyG SGConv) -> dense propagation matrix
# ---------------------------------------------------------------------------
def gcn_norm_dense(edge_index, edge_weight, num_nodes):
    row, col = edge_index[0], edge_index[1]
    loop = jnp.arange(num_nodes, dtype=row.dtype)
    row = jnp.concatenate([row, loop])
    col = jnp.concatenate([col, loop])
    ew = jnp.concatenate([edge_weight, jnp.ones((num_nodes,), edge_weight.dtype)])
    deg = jnp.zeros((num_nodes,), ew.dtype).at[col].add(ew)
    deg_inv_sqrt = jnp.where(deg > 0, deg ** -0.5, 0.0)
    norm = deg_inv_sqrt[row] * ew * deg_inv_sqrt[col]
    # messages flow source(row) -> target(col):  x_new = S @ x, S[col, row] += norm
    S = jnp.zeros((num_nodes, num_nodes), ew.dtype).at[col, row].add(norm)
    return S


def rgnn_forward(len_y, x, edge_index, batch, weight, params, *, K,
                 prop_dtype=jnp.bfloat16, tile_m=512, force_mode=None):
    """Mirrors rgnn.forward with domain_adaptation=0, inference-mode dropout."""
    N = x.shape[0]
    B = int(len_y)
    # edge_weight = weight concatenated len_y times (original + (len_y-1) cats)
    edge_weight = jnp.tile(weight, (B,))
    S = gcn_norm_dense(edge_index, edge_weight, N)
    # pooling matrix for global_add_pool(x, batch, size=batch_size)
    P = (batch[None, :] == jnp.arange(B, dtype=batch.dtype)[:, None]).astype(jnp.float32)
    out = rgnn_pallas(S, x, params["Wc"], params["bc"], P, params["Wf"], params["bf"],
                      K=K, prop_dtype=prop_dtype, tile_m=tile_m, force_mode=force_mode)
    domain_output = None  # domain_adaptation == 0
    return out, domain_output


# ---------------------------------------------------------------------------
# Pure-JAX reference (for correctness check)
# ---------------------------------------------------------------------------
def rgnn_reference(len_y, x, edge_index, batch, weight, params, *, K):
    N = x.shape[0]
    B = int(len_y)
    edge_weight = jnp.tile(weight, (B,))
    S = gcn_norm_dense(edge_index, edge_weight, N)
    h = x
    for _ in range(K):
        h = S @ h
    h = h @ params["Wc"] + params["bc"]
    h = jax.nn.softmax(h, axis=-1)
    P = (batch[None, :] == jnp.arange(B, dtype=batch.dtype)[:, None]).astype(jnp.float32)
    pooled = P @ h
    logits = pooled @ params["Wf"] + params["bf"]
    return jax.nn.softmax(logits, axis=-1)


def _build_batch(key, len_y, nodes_per_graph, num_in, num_hidden, num_class):
    N = len_y * nodes_per_graph
    k_x, k_w, k_wc, k_bc, k_wf, k_bf = jax.random.split(key, 6)
    x = jax.random.normal(k_x, (N, num_in), dtype=jnp.float32)
    # fully-connected (no self-loop) graph per sample
    src, dst = [], []
    for g in range(len_y):
        off = g * nodes_per_graph
        for a in range(nodes_per_graph):
            for b in range(nodes_per_graph):
                if a != b:
                    src.append(off + a)
                    dst.append(off + b)
    edge_index = jnp.array([src, dst], dtype=jnp.int32)
    edges_per_graph = nodes_per_graph * (nodes_per_graph - 1)
    weight = jax.random.uniform(k_w, (edges_per_graph,), dtype=jnp.float32,
                                minval=0.1, maxval=1.0)
    batch = jnp.repeat(jnp.arange(len_y, dtype=jnp.int32), nodes_per_graph)
    params = {
        "Wc": jax.random.normal(k_wc, (num_in, num_hidden), dtype=jnp.float32) * 0.1,
        "bc": jax.random.normal(k_bc, (1, num_hidden), dtype=jnp.float32) * 0.1,
        "Wf": jax.random.normal(k_wf, (num_hidden, num_class), dtype=jnp.float32) * 0.1,
        "bf": jax.random.normal(k_bf, (1, num_class), dtype=jnp.float32) * 0.1,
    }
    return x, edge_index, batch, weight, params


if __name__ == "__main__":
    len_y, npg, num_in, num_hidden, num_class = 2, 8, 4, 32, 3
    x, ei, batch, w, params = _build_batch(jax.random.PRNGKey(0), len_y, npg,
                                           num_in, num_hidden, num_class)

    # K=2, f32 propagation (auto -> resident-S path): tight check.
    ref = rgnn_reference(len_y, x, ei, batch, w, params, K=2)
    out, dom = rgnn_forward(len_y, x, ei, batch, w, params, K=2,
                            prop_dtype=jnp.float32)
    out = jax.block_until_ready(out)
    assert out.shape == (len_y, num_class) and dom is None
    assert jnp.allclose(out, ref, atol=1e-4, rtol=1e-4), (out, ref)

    # K=2, bf16 propagation (production default): relaxed tolerance.
    out_bf, _ = rgnn_forward(len_y, x, ei, batch, w, params, K=2,
                             prop_dtype=jnp.bfloat16)
    out_bf = jax.block_until_ready(out_bf)
    assert jnp.allclose(out_bf, ref, atol=1e-2, rtol=1e-2), (out_bf, ref)
    assert jnp.allclose(jnp.sum(out_bf, axis=-1), 1.0, atol=1e-3)

    # K=1 and K=3 exercise the single-hop fast path and both ping/pong parities.
    for kk in (1, 3):
        ref_k = rgnn_reference(len_y, x, ei, batch, w, params, K=kk)
        out_k, _ = rgnn_forward(len_y, x, ei, batch, w, params, K=kk,
                                prop_dtype=jnp.float32)
        out_k = jax.block_until_ready(out_k)
        assert jnp.allclose(out_k, ref_k, atol=1e-4, rtol=1e-4), (kk, out_k, ref_k)

    # Medium graph forced through the column-tiled streaming path
    # (grid = (K, row_tiles, col_tiles)) to cover the large-N / v7x configuration.
    x2, ei2, batch2, w2, params2 = _build_batch(jax.random.PRNGKey(0), 2, 96,
                                                num_in, num_hidden, num_class)
    ref2 = rgnn_reference(2, x2, ei2, batch2, w2, params2, K=2)
    out2, _ = rgnn_forward(2, x2, ei2, batch2, w2, params2, K=2,
                           prop_dtype=jnp.float32, tile_m=128, force_mode="tiled")
    out2 = jax.block_until_ready(out2)
    assert jnp.allclose(out2, ref2, atol=1e-4, rtol=1e-4), (out2, ref2)

    print("KERNEL_OK")
</pallas_src>

<mosaic_0001>
module attributes {stable_mosaic.version = 11 : i64} {
  func.func @_rgnn_kernel(%arg0: i32, %arg1: i32, %arg2: i32, %arg3: memref<16x16xf32, #tpu.memory_space<vmem>>, %arg4: memref<16x32xf32, #tpu.memory_space<vmem>>, %arg5: memref<1x32xf32, #tpu.memory_space<vmem>>, %arg6: memref<2x16xf32, #tpu.memory_space<vmem>>, %arg7: memref<32x3xf32, #tpu.memory_space<vmem>>, %arg8: memref<1x3xf32, #tpu.memory_space<vmem>>, %arg9: memref<2x3xf32, #tpu.memory_space<vmem>>, %arg10: memref<16x32xf32, #tpu.memory_space<vmem>>, %arg11: memref<16x32xf32, #tpu.memory_space<vmem>>, %arg12: memref<16x32xf32, #tpu.memory_space<vmem>>, %arg13: memref<2x32xf32, #tpu.memory_space<vmem>>) attributes {dimension_semantics = [#tpu.dimension_semantics<arbitrary>, #tpu.dimension_semantics<arbitrary>, #tpu.dimension_semantics<arbitrary>], iteration_bounds = array<i64: 2, 1, 1>, scalar_prefetch = 0 : i64, scratch_operands = 4 : i64, tpu.core_type = #tpu.core_type<tc>, window_params = [{pipeline_mode = #tpu.pipeline_mode<synchronous>, transform_indices = @transform_0, window_bounds = array<i64: 16, 16>}, {pipeline_mode = #tpu.pipeline_mode<synchronous>, transform_indices = @transform_1, window_bounds = array<i64: 16, 32>}, {pipeline_mode = #tpu.pipeline_mode<synchronous>, transform_indices = @transform_2, window_bounds = array<i64: 1, 32>}, {transform_indices = @transform_3, window_bounds = array<i64: 2, 16>}, {pipeline_mode = #tpu.pipeline_mode<synchronous>, transform_indices = @transform_4, window_bounds = array<i64: 32, 3>}, {pipeline_mode = #tpu.pipeline_mode<synchronous>, transform_indices = @transform_5, window_bounds = array<i64: 1, 3>}, {pipeline_mode = #tpu.pipeline_mode<synchronous>, transform_indices = @transform_6, window_bounds = array<i64: 2, 3>}]} {
    %c1_i32 = arith.constant 1 : i32
    %0 = arith.cmpi eq, %arg0, %c1_i32 : i32
    %c0_i32 = arith.constant 0 : i32
    %1 = arith.cmpi eq, %arg2, %c0_i32 : i32
    %c16_i32 = arith.constant 16 : i32
    %2 = arith.muli %arg1, %c16_i32 : i32
    %3 = tpu.assume_multiple %2, 16 : i32
    %c16_i32_0 = arith.constant 16 : i32
    %4 = arith.muli %arg2, %c16_i32_0 : i32
    %5 = tpu.assume_multiple %4, 16 : i32
    %c0_i32_1 = arith.constant 0 : i32
    %6 = arith.cmpi eq, %arg0, %c0_i32_1 : i32
    %c0_i32_2 = arith.constant 0 : i32
    %7 = arith.cmpi eq, %arg1, %c0_i32_2 : i32
    %8 = arith.andi %6, %7 : i1
    %c0_i32_3 = arith.constant 0 : i32
    %9 = arith.cmpi eq, %arg2, %c0_i32_3 : i32
    %10 = arith.andi %8, %9 : i1
    %11 = arith.extui %10 : i1 to i32
    %c0_i32_4 = arith.constant 0 : i32
    %12 = arith.cmpi ne, %11, %c0_i32_4 : i32
    scf.if %12 {
      %c0_41 = arith.constant 0 : index
      %c0_42 = arith.constant 0 : index
      %83 = vector.load %arg4[%c0_41, %c0_42] : memref<16x32xf32, #tpu.memory_space<vmem>>, vector<16x32xf32>
      %c0_43 = arith.constant 0 : index
      %c0_44 = arith.constant 0 : index
      %84 = vector.load %arg10[%c0_43, %c0_44] : memref<16x32xf32, #tpu.memory_space<vmem>>, vector<16x32xf32>
      tpu.vector_store %arg10[%c0_43, %c0_44], %83 {strides = array<i32>} : memref<16x32xf32, #tpu.memory_space<vmem>>, vector<16x32xf32>,
      %cst = arith.constant 0.000000e+00 : f32
      %85 = vector.broadcast %cst : f32 to vector<2x32xf32>
      %c0_45 = arith.constant 0 : index
      %c0_46 = arith.constant 0 : index
      %86 = vector.load %arg13[%c0_45, %c0_46] : memref<2x32xf32, #tpu.memory_space<vmem>>, vector<2x32xf32>
      tpu.vector_store %arg13[%c0_45, %c0_46], %85 {strides = array<i32>} : memref<2x32xf32, #tpu.memory_space<vmem>>, vector<2x32xf32>,
    } else {
    }
    %c0_i32_5 = arith.constant 0 : i32
    %13 = arith.cmpi eq, %arg2, %c0_i32_5 : i32
    %14 = arith.extui %13 : i1 to i32
    %c0_i32_6 = arith.constant 0 : i32
    %15 = arith.cmpi ne, %14, %c0_i32_6 : i32
    scf.if %15 {
      %cst = arith.constant 0.000000e+00 : f32
      %83 = vector.broadcast %cst : f32 to vector<16x32xf32>
      %c0_41 = arith.constant 0 : index
      %c0_42 = arith.constant 0 : index
      %84 = vector.load %arg12[%c0_41, %c0_42] : memref<16x32xf32, #tpu.memory_space<vmem>>, vector<16x32xf32>
      tpu.vector_store %arg12[%c0_41, %c0_42], %83 {strides = array<i32>} : memref<16x32xf32, #tpu.memory_space<vmem>>, vector<16x32xf32>,
    } else {
    }
    %16 = arith.index_cast %3 : i32 to index
    %c0 = arith.constant 0 : index
    %17 = vector.load %arg3[%16, %c0] : memref<16x16xf32, #tpu.memory_space<vmem>>, vector<16x16xf32>
    %c2_i32 = arith.constant 2 : i32
    %c0_i32_7 = arith.constant 0 : i32
    %18 = arith.cmpi eq, %c2_i32, %c0_i32_7 : i32
    %c1_i32_8 = arith.constant 1 : i32
    %19 = arith.select %18, %c1_i32_8, %c2_i32 : i32
    %20 = arith.remsi %arg0, %19 : i32
    %c0_i32_9 = arith.constant 0 : i32
    %21 = arith.cmpi ne, %20, %c0_i32_9 : i32
    %c0_i32_10 = arith.constant 0 : i32
    %22 = arith.cmpi slt, %20, %c0_i32_10 : i32
    %c0_i32_11 = arith.constant 0 : i32
    %23 = arith.cmpi slt, %19, %c0_i32_11 : i32
    %24 = arith.xori %22, %23 : i1
    %25 = arith.andi %24, %21 : i1
    %26 = arith.addi %20, %19 : i32
    %27 = arith.select %25, %26, %20 : i32
    %c0_i32_12 = arith.constant 0 : i32
    %28 = arith.cmpi eq, %27, %c0_i32_12 : i32
    %29 = arith.extui %28 : i1 to i32
    %c0_i32_13 = arith.constant 0 : i32
    %30 = arith.cmpi ne, %29, %c0_i32_13 : i32
    scf.if %30 {
      %c0_41 = arith.constant 0 : index
      %c0_42 = arith.constant 0 : index
      %83 = vector.load %arg12[%c0_41, %c0_42] : memref<16x32xf32, #tpu.memory_space<vmem>>, vector<16x32xf32>
      %84 = arith.index_cast %5 : i32 to index
      %c0_43 = arith.constant 0 : index
      %85 = vector.load %arg10[%84, %c0_43] : memref<16x32xf32, #tpu.memory_space<vmem>>, vector<16x32xf32>
      %cst = arith.constant dense<0.000000e+00> : vector<16x32xf32>
      %86 = tpu.matmul %17, %85, %cst {dimension_numbers = #tpu.dot_dimension_numbers<[1], [0], [0], [1], [0, 0, 1, 1], [], []>} : vector<16x16xf32>, vector<16x32xf32>, vector<16x32xf32> -> vector<16x32xf32>
      %87 = arith.addf %83, %86 : vector<16x32xf32>
      %c0_44 = arith.constant 0 : index
      %c0_45 = arith.constant 0 : index
      %88 = vector.load %arg12[%c0_44, %c0_45] : memref<16x32xf32, #tpu.memory_space<vmem>>, vector<16x32xf32>
      tpu.vector_store %arg12[%c0_44, %c0_45], %87 {strides = array<i32>} : memref<16x32xf32, #tpu.memory_space<vmem>>, vector<16x32xf32>,
    } else {
    }
    %c2_i32_14 = arith.constant 2 : i32
    %c0_i32_15 = arith.constant 0 : i32
    %31 = arith.cmpi eq, %c2_i32_14, %c0_i32_15 : i32
    %c1_i32_16 = arith.constant 1 : i32
    %32 = arith.select %31, %c1_i32_16, %c2_i32_14 : i32
    %33 = arith.remsi %arg0, %32 : i32
    %c0_i32_17 = arith.constant 0 : i32
    %34 = arith.cmpi ne, %33, %c0_i32_17 : i32
    %c0_i32_18 = arith.constant 0 : i32
    %35 = arith.cmpi slt, %33, %c0_i32_18 : i32
    %c0_i32_19 = arith.constant 0 : i32
    %36 = arith.cmpi slt, %32, %c0_i32_19 : i32
    %37 = arith.xori %35, %36 : i1
    %38 = arith.andi %37, %34 : i1
    %39 = arith.addi %33, %32 : i32
    %40 = arith.select %38, %39, %33 : i32
    %c1_i32_20 = arith.constant 1 : i32
    %41 = arith.cmpi eq, %40, %c1_i32_20 : i32
    %42 = arith.extui %41 : i1 to i32
    %c0_i32_21 = arith.constant 0 : i32
    %43 = arith.cmpi ne, %42, %c0_i32_21 : i32
    scf.if %43 {
      %c0_41 = arith.constant 0 : index
      %c0_42 = arith.constant 0 : index
      %83 = vector.load %arg12[%c0_41, %c0_42] : memref<16x32xf32, #tpu.memory_space<vmem>>, vector<16x32xf32>
      %84 = arith.index_cast %5 : i32 to index
      %c0_43 = arith.constant 0 : index
      %85 = vector.load %arg11[%84, %c0_43] : memref<16x32xf32, #tpu.memory_space<vmem>>, vector<16x32xf32>
      %cst = arith.constant dense<0.000000e+00> : vector<16x32xf32>
      %86 = tpu.matmul %17, %85, %cst {dimension_numbers = #tpu.dot_dimension_numbers<[1], [0], [0], [1], [0, 0, 1, 1], [], []>} : vector<16x16xf32>, vector<16x32xf32>, vector<16x32xf32> -> vector<16x32xf32>
      %87 = arith.addf %83, %86 : vector<16x32xf32>
      %c0_44 = arith.constant 0 : index
      %c0_45 = arith.constant 0 : index
      %88 = vector.load %arg12[%c0_44, %c0_45] : memref<16x32xf32, #tpu.memory_space<vmem>>, vector<16x32xf32>
      tpu.vector_store %arg12[%c0_44, %c0_45], %87 {strides = array<i32>} : memref<16x32xf32, #tpu.memory_space<vmem>>, vector<16x32xf32>,
    } else {
    }
    %true = arith.constant true
    %44 = arith.xori %0, %true : i1
    %45 = arith.andi %1, %44 : i1
    %c2_i32_22 = arith.constant 2 : i32
    %c0_i32_23 = arith.constant 0 : i32
    %46 = arith.cmpi eq, %c2_i32_22, %c0_i32_23 : i32
    %c1_i32_24 = arith.constant 1 : i32
    %47 = arith.select %46, %c1_i32_24, %c2_i32_22 : i32
    %48 = arith.remsi %arg0, %47 : i32
    %c0_i32_25 = arith.constant 0 : i32
    %49 = arith.cmpi ne, %48, %c0_i32_25 : i32
    %c0_i32_26 = arith.constant 0 : i32
    %50 = arith.cmpi slt, %48, %c0_i32_26 : i32
    %c0_i32_27 = arith.constant 0 : i32
    %51 = arith.cmpi slt, %47, %c0_i32_27 : i32
    %52 = arith.xori %50, %51 : i1
    %53 = arith.andi %52, %49 : i1
    %54 = arith.addi %48, %47 : i32
    %55 = arith.select %53, %54, %48 : i32
    %c0_i32_28 = arith.constant 0 : i32
    %56 = arith.cmpi eq, %55, %c0_i32_28 : i32
    %57 = arith.andi %45, %56 : i1
    %58 = arith.extui %57 : i1 to i32
    %c0_i32_29 = arith.constant 0 : i32
    %59 = arith.cmpi ne, %58, %c0_i32_29 : i32
    scf.if %59 {
      %c0_41 = arith.constant 0 : index
      %c0_42 = arith.constant 0 : index
      %83 = vector.load %arg12[%c0_41, %c0_42] : memref<16x32xf32, #tpu.memory_space<vmem>>, vector<16x32xf32>
      %84 = arith.index_cast %3 : i32 to index
      %c0_43 = arith.constant 0 : index
      %85 = vector.load %arg11[%84, %c0_43] : memref<16x32xf32, #tpu.memory_space<vmem>>, vector<16x32xf32>
      tpu.vector_store %arg11[%84, %c0_43], %83 {strides = array<i32>} : memref<16x32xf32, #tpu.memory_space<vmem>>, vector<16x32xf32>,
    } else {
    }
    %60 = arith.andi %1, %44 : i1
    %c2_i32_30 = arith.constant 2 : i32
    %c0_i32_31 = arith.constant 0 : i32
    %61 = arith.cmpi eq, %c2_i32_30, %c0_i32_31 : i32
    %c1_i32_32 = arith.constant 1 : i32
    %62 = arith.select %61, %c1_i32_32, %c2_i32_30 : i32
    %63 = arith.remsi %arg0, %62 : i32
    %c0_i32_33 = arith.constant 0 : i32
    %64 = arith.cmpi ne, %63, %c0_i32_33 : i32
    %c0_i32_34 = arith.constant 0 : i32
    %65 = arith.cmpi slt, %63, %c0_i32_34 : i32
    %c0_i32_35 = arith.constant 0 : i32
    %66 = arith.cmpi slt, %62, %c0_i32_35 : i32
    %67 = arith.xori %65, %66 : i1
    %68 = arith.andi %67, %64 : i1
    %69 = arith.addi %63, %62 : i32
    %70 = arith.select %68, %69, %63 : i32
    %c1_i32_36 = arith.constant 1 : i32
    %71 = arith.cmpi eq, %70, %c1_i32_36 : i32
    %72 = arith.andi %60, %71 : i1
    %73 = arith.extui %72 : i1 to i32
    %c0_i32_37 = arith.constant 0 : i32
    %74 = arith.cmpi ne, %73, %c0_i32_37 : i32
    scf.if %74 {
      %c0_41 = arith.constant 0 : index
      %c0_42 = arith.constant 0 : index
      %83 = vector.load %arg12[%c0_41, %c0_42] : memref<16x32xf32, #tpu.memory_space<vmem>>, vector<16x32xf32>
      %84 = arith.index_cast %3 : i32 to index
      %c0_43 = arith.constant 0 : index
      %85 = vector.load %arg10[%84, %c0_43] : memref<16x32xf32, #tpu.memory_space<vmem>>, vector<16x32xf32>
      tpu.vector_store %arg10[%84, %c0_43], %83 {strides = array<i32>} : memref<16x32xf32, #tpu.memory_space<vmem>>, vector<16x32xf32>,
    } else {
    }
    %75 = arith.andi %1, %0 : i1
    %76 = arith.extui %75 : i1 to i32
    %c0_i32_38 = arith.constant 0 : i32
    %77 = arith.cmpi ne, %76, %c0_i32_38 : i32
    scf.if %77 {
      %c0_41 = arith.constant 0 : index
      %c0_42 = arith.constant 0 : index
      %83 = vector.load %arg12[%c0_41, %c0_42] : memref<16x32xf32, #tpu.memory_space<vmem>>, vector<16x32xf32>
      %c0_43 = arith.constant 0 : index
      %c0_44 = arith.constant 0 : index
      %84 = vector.load %arg5[%c0_43, %c0_44] : memref<1x32xf32, #tpu.memory_space<vmem>>, vector<1x32xf32>
      %85 = vector.broadcast %84 : vector<1x32xf32> to vector<16x32xf32>
      %86 = arith.addf %83, %85 : vector<16x32xf32>
      %cst = arith.constant dense<0xFF800000> : vector<16xf32>
      %87 = vector.multi_reduction <maximumf>, %86, %cst [1] : vector<16x32xf32> to vector<16xf32>
      %88 = vector.shape_cast %87 : vector<16xf32> to vector<16x1xf32>
      %89 = vector.broadcast %88 : vector<16x1xf32> to vector<16x32xf32>
      %90 = arith.subf %86, %89 : vector<16x32xf32>
      %91 = math.exp %90 : vector<16x32xf32>
      %cst_45 = arith.constant dense<0.000000e+00> : vector<16xf32>
      %92 = vector.multi_reduction <add>, %91, %cst_45 [1] : vector<16x32xf32> to vector<16xf32>
      %93 = vector.shape_cast %92 : vector<16xf32> to vector<16x1xf32>
      %94 = vector.broadcast %93 : vector<16x1xf32> to vector<16x32xf32>
      %95 = arith.divf %91, %94 : vector<16x32xf32>
      %c0_46 = arith.constant 0 : index
      %c0_47 = arith.constant 0 : index
      %96 = vector.load %arg13[%c0_46, %c0_47] : memref<2x32xf32, #tpu.memory_space<vmem>>, vector<2x32xf32>
      %c0_48 = arith.constant 0 : index
      %c0_49 = arith.constant 0 : index
      %97 = vector.load %arg6[%c0_48, %c0_49] : memref<2x16xf32, #tpu.memory_space<vmem>>, vector<2x16xf32>
      %cst_50 = arith.constant dense<0.000000e+00> : vector<2x32xf32>
      %98 = tpu.matmul %97, %95, %cst_50 {dimension_numbers = #tpu.dot_dimension_numbers<[1], [0], [0], [1], [0, 0, 1, 1], [], []>} : vector<2x16xf32>, vector<16x32xf32>, vector<2x32xf32> -> vector<2x32xf32>
      %99 = arith.addf %96, %98 : vector<2x32xf32>
      %c0_51 = arith.constant 0 : index
      %c0_52 = arith.constant 0 : index
      %100 = vector.load %arg13[%c0_51, %c0_52] : memref<2x32xf32, #tpu.memory_space<vmem>>, vector<2x32xf32>
      tpu.vector_store %arg13[%c0_51, %c0_52], %99 {strides = array<i32>} : memref<2x32xf32, #tpu.memory_space<vmem>>, vector<2x32xf32>,
    } else {
    }
    %78 = arith.andi %0, %1 : i1
    %c0_i32_39 = arith.constant 0 : i32
    %79 = arith.cmpi eq, %arg1, %c0_i32_39 : i32
    %80 = arith.andi %78, %79 : i1
    %81 = arith.extui %80 : i1 to i32
    %c0_i32_40 = arith.constant 0 : i32
    %82 = arith.cmpi ne, %81, %c0_i32_40 : i32
    scf.if %82 {
      %c0_41 = arith.constant 0 : index
      %c0_42 = arith.constant 0 : index
      %83 = vector.load %arg13[%c0_41, %c0_42] : memref<2x32xf32, #tpu.memory_space<vmem>>, vector<2x32xf32>
      %c0_43 = arith.constant 0 : index
      %c0_44 = arith.constant 0 : index
      %84 = vector.load %arg7[%c0_43, %c0_44] : memref<32x3xf32, #tpu.memory_space<vmem>>, vector<32x3xf32>
      %cst = arith.constant dense<0.000000e+00> : vector<2x3xf32>
      %85 = tpu.matmul %83, %84, %cst {dimension_numbers = #tpu.dot_dimension_numbers<[1], [0], [0], [1], [0, 0, 1, 1], [], []>} : vector<2x32xf32>, vector<32x3xf32>, vector<2x3xf32> -> vector<2x3xf32>
      %c0_45 = arith.constant 0 : index
      %c0_46 = arith.constant 0 : index
      %86 = vector.load %arg8[%c0_45, %c0_46] : memref<1x3xf32, #tpu.memory_space<vmem>>, vector<1x3xf32>
      %87 = vector.broadcast %86 : vector<1x3xf32> to vector<2x3xf32>
      %88 = arith.addf %85, %87 : vector<2x3xf32>
      %cst_47 = arith.constant dense<0xFF800000> : vector<2xf32>
      %89 = vector.multi_reduction <maximumf>, %88, %cst_47 [1] : vector<2x3xf32> to vector<2xf32>
      %90 = vector.shape_cast %89 : vector<2xf32> to vector<2x1xf32>
      %91 = vector.broadcast %90 : vector<2x1xf32> to vector<2x3xf32>
      %92 = arith.subf %88, %91 : vector<2x3xf32>
      %93 = math.exp %92 : vector<2x3xf32>
      %cst_48 = arith.constant dense<0.000000e+00> : vector<2xf32>
      %94 = vector.multi_reduction <add>, %93, %cst_48 [1] : vector<2x3xf32> to vector<2xf32>
      %95 = vector.shape_cast %94 : vector<2xf32> to vector<2x1xf32>
      %96 = vector.broadcast %95 : vector<2x1xf32> to vector<2x3xf32>
      %97 = arith.divf %93, %96 : vector<2x3xf32>
      %c0_49 = arith.constant 0 : index
      %c0_50 = arith.constant 0 : index
      %98 = vector.load %arg9[%c0_49, %c0_50] : memref<2x3xf32, #tpu.memory_space<vmem>>, vector<2x3xf32>
      tpu.vector_store %arg9[%c0_49, %c0_50], %97 {strides = array<i32>} : memref<2x3xf32, #tpu.memory_space<vmem>>, vector<2x3xf32>,
    } else {
    }
    return
  }
  func.func @transform_0(%arg0: i32, %arg1: i32, %arg2: i32) -> (i32, i32) {
    %c0_i32 = arith.constant 0 : i32
    %c0_i32_0 = arith.constant 0 : i32
    %c0_i32_1 = arith.constant 0 : i32
    return %c0_i32, %c0_i32_0 : i32, i32
  }
  func.func @transform_1(%arg0: i32, %arg1: i32, %arg2: i32) -> (i32, i32) {
    %c0_i32 = arith.constant 0 : i32
    %c0_i32_0 = arith.constant 0 : i32
    %c0_i32_1 = arith.constant 0 : i32
    return %c0_i32, %c0_i32_0 : i32, i32
  }
  func.func @transform_2(%arg0: i32, %arg1: i32, %arg2: i32) -> (i32, i32) {
    %c0_i32 = arith.constant 0 : i32
    %c0_i32_0 = arith.constant 0 : i32
    %c0_i32_1 = arith.constant 0 : i32
    return %c0_i32, %c0_i32_0 : i32, i32
  }
  func.func @transform_3(%arg0: i32, %arg1: i32, %arg2: i32) -> (i32, i32) {
    %c0_i32 = arith.constant 0 : i32
    %c0_i32_0 = arith.constant 0 : i32
    return %c0_i32, %arg1 : i32, i32
  }
  func.func @transform_4(%arg0: i32, %arg1: i32, %arg2: i32) -> (i32, i32) {
    %c0_i32 = arith.constant 0 : i32
    %c0_i32_0 = arith.constant 0 : i32
    %c0_i32_1 = arith.constant 0 : i32
    return %c0_i32, %c0_i32_0 : i32, i32
  }
  func.func @transform_5(%arg0: i32, %arg1: i32, %arg2: i32) -> (i32, i32) {
    %c0_i32 = arith.constant 0 : i32
    %c0_i32_0 = arith.constant 0 : i32
    %c0_i32_1 = arith.constant 0 : i32
    return %c0_i32, %c0_i32_0 : i32, i32
  }
  func.func @transform_6(%arg0: i32, %arg1: i32, %arg2: i32) -> (i32, i32) {
    %c0_i32 = arith.constant 0 : i32
    %c0_i32_0 = arith.constant 0 : i32
    %c0_i32_1 = arith.constant 0 : i32
    return %c0_i32, %c0_i32_0 : i32, i32
  }
}

</mosaic_0001>

<llo_original>
// kernel: tpu_custom_call.1
$region0: #{tpu_custom_call.1}
  #allocation0 [shape = 'u32[]', space=smem, size = 0x4, offset = 0x4, fixed_abs, tag = 'smem constant byte address 0x4 - core index']
  #allocation1 [shape = 'u32[144,128]{1,0:T(1,128)}', space=vmem, size = 0x12000, scoped, tag = 'internal scratch']
  #allocation2 [shape = 'f32[16,32]{1,0:T(8,128)}', space=vmem, size = 0x2000, scoped, tag = 'scratch operand']
  #allocation3 [shape = 'f32[16,32]{1,0:T(8,128)}', space=vmem, size = 0x2000, scoped, tag = 'scratch operand']
  #allocation4 [shape = 'f32[16,32]{1,0:T(8,128)}', space=vmem, size = 0x2000, scoped, tag = 'scratch operand']
  #allocation5 [shape = 'f32[2,32]{1,0:T(2,128)}', space=vmem, size = 0x400, scoped, tag = 'scratch operand']
  %s0 = inlined_call_operand.vmem [shape: f32[16,16], index: 0, kind: input, shape index: {}]
  %s1 = inlined_call_operand.vmem [shape: f32[16,32], index: 1, kind: input, shape index: {}]
  %s2 = inlined_call_operand.vmem [shape: f32[1,32], index: 2, kind: input, shape index: {}]
  %s3 = inlined_call_operand.vmem [shape: f32[2,16], index: 3, kind: input, shape index: {}]
  %s4 = inlined_call_operand.vmem [shape: f32[32,3], index: 4, kind: input, shape index: {}]
  %s5 = inlined_call_operand.vmem [shape: f32[1,3], index: 5, kind: input, shape index: {}]
  %s6 = inlined_call_operand.hbm [shape: f32[2,3], index: 6, kind: output, shape index: {}]
  %s7 = sld [smem:[#allocation0]]
  $region89: #{tpu_custom_call.1} parent=0
    _
  %s9 = ssub.s32 1, %s7
  %s10 = scalar_select 0, %s9, %s7
  $region1: #{tpu_custom_call.1} parent=0
    #allocation6 [shape = 'u8[1024]{0}', space=vmem, size = 0x400, scoped, tag = 'output window, operand 0, single buffered']
    #allocation7 [shape = 's32[2]{0}', space=sflag, size = 0x8, scoped, tag = 'scoped memory for tpu_custom_call.1']
    %11 = vsyncpa [#allocation7], 0
    loop: start=0, step=1, limit=4
    $region2: #{tpu_custom_call.1} parent=1 // loop_pre_header
      _
    $region3: #{tpu_custom_call.1} parent=1 // loop_header
      %s13 = sphi 0, %s17
      %p14 = scmp.ge.s32.totalorder %s13, 4
      %s20 = sphi 0, %s39
      %s21 = sphi 0, %s35
      %s22 = sphi 0, %s31
      %s23 = sphi 0, %s20
      %s24 = sphi 0, %s21
      %s25 = sphi 0, %s22
      %s26 = sphi 0, %s23
      %s27 = sphi 0, %s24
      %s28 = sphi 0, %s25
      %s40 = sphi 0, %s40
      %s42 = sphi 0, %s40
      %s43 = sphi 0, %s42
      %s57 = sphi 0, %s43
      %s61 = sphi 0, %s61
      %s63 = sphi 0, %s61
      %s64 = sphi 0, %s63
      %s78 = sphi 0, %s64
      %s82 = sphi 0, %s82
      %s84 = sphi 0, %s82
      %s85 = sphi 0, %s84
      %s99 = sphi 0, %s85
      %s105 = sphi 0, %s107
      %s108 = sphi 0, %s105
      %s109 = sphi 0, %s108
      %s125 = sphi 0, %s109
      %s129 = sphi 0, %s129
      %s131 = sphi 0, %s129
      %s132 = sphi 0, %s131
      %s146 = sphi 0, %s132
      %s150 = sphi 0, %s150
      %s152 = sphi 0, %s150
      %s153 = sphi 0, %s152
      %s167 = sphi 0, %s153
      %s171 = sphi 0, %s171
      %s173 = sphi 0, %s171
      %s174 = sphi 0, %s173
      %s188 = sphi 0, %s174
    $region4: #{tpu_custom_call.1} parent=1 // loop_header_branch
      %16 = sbr.rel (%p14) target = $region8
    $region5: #{tpu_custom_call.1} parent=1 // loop_body
      %s18 = ssub.s32 %s13, 1
      %s19 = ssub.s32 %s13, 2
      %s29 = sadd.s32 1, %s22
      %p30 = scmp.ge.s32.totalorder %s29, 1
      %s31 = scalar_select %p30, 0, %s29
      %s32 = sadd.s32 1, %s21
      %s33 = scalar_select %p30, %s32, %s21
      %p34 = scmp.ge.s32.totalorder %s33, 1
      %s35 = scalar_select %p34, 0, %s33
      %s36 = sadd.s32 1, %s20
      %s37 = scalar_select %p34, %s36, %s20
      %p38 = scmp.ge.s32.totalorder %s37, 2
      %s39 = scalar_select %p38, 0, %s37
      %s41 = sadd.s32 %s40, 1
      %p44 = scmp.eq.s32.totalorder %s13, 1
      %p45 = scmp.ne.s32.totalorder %s40, %s42
      %p46 = scmp.eq.s32.totalorder %s13, 0
      %p47 = por %p45, %p46
      %p48 = scmp.ne.s32.totalorder %s40, %s42
      %p49 = scmp.eq.s32.totalorder %s18, 1
      %p50 = por %p48, %p49
      %p51 = scmp.ne.s32.totalorder %s42, %s43
      %p52 = scmp.eq.s32.totalorder %s18, 0
      %p53 = por %p51, %p52
      %p54 = scmp.ne.s32.totalorder %s42, %s43
      %p55 = scmp.eq.s32.totalorder %s19, 1
      %p56 = por %p54, %p55
      %p58 = scmp.ne.s32.totalorder %s43, %s57
      %p59 = scmp.eq.s32.totalorder %s19, 0
      %p60 = por %p58, %p59
      %s62 = sadd.s32 %s61, 1
      %p65 = scmp.eq.s32.totalorder %s13, 1
      %p66 = scmp.ne.s32.totalorder %s61, %s63
      %p67 = scmp.eq.s32.totalorder %s13, 0
      %p68 = por %p66, %p67
      %p69 = scmp.ne.s32.totalorder %s61, %s63
      %p70 = scmp.eq.s32.totalorder %s18, 1
      %p71 = por %p69, %p70
      %p72 = scmp.ne.s32.totalorder %s63, %s64
      %p73 = scmp.eq.s32.totalorder %s18, 0
      %p74 = por %p72, %p73
      %p75 = scmp.ne.s32.totalorder %s63, %s64
      %p76 = scmp.eq.s32.totalorder %s19, 1
      %p77 = por %p75, %p76
      %p79 = scmp.ne.s32.totalorder %s64, %s78
      %p80 = scmp.eq.s32.totalorder %s19, 0
      %p81 = por %p79, %p80
      %s83 = sadd.s32 %s82, 1
      %p86 = scmp.eq.s32.totalorder %s13, 1
      %p87 = scmp.ne.s32.totalorder %s82, %s84
      %p88 = scmp.eq.s32.totalorder %s13, 0
      %p89 = por %p87, %p88
      %p90 = scmp.ne.s32.totalorder %s82, %s84
      %p91 = scmp.eq.s32.totalorder %s18, 1
      %p92 = por %p90, %p91
      %p93 = scmp.ne.s32.totalorder %s84, %s85
      %p94 = scmp.eq.s32.totalorder %s18, 0
      %p95 = por %p93, %p94
      %p96 = scmp.ne.s32.totalorder %s84, %s85
      %p97 = scmp.eq.s32.totalorder %s19, 1
      %p98 = por %p96, %p97
      %p100 = scmp.ne.s32.totalorder %s85, %s99
      %p101 = scmp.eq.s32.totalorder %s19, 0
      %p102 = por %p100, %p101
      %s103 = ssub.s32 %s21, %s35
      %p104 = scmp.eq.s32.totalorder %s103, 0
      %s106 = sadd.s32 %s105, 1
      %s107 = scalar_select %p104, %s105, %s106
      %p110 = pneg %p104
      %p111 = scmp.eq.s32.totalorder %s13, 1
      %p112 = por %p110, %p111
      %p113 = scmp.ne.s32.totalorder %s105, %s108
      %p114 = scmp.eq.s32.totalorder %s13, 0
      %p115 = por %p113, %p114
      %p116 = scmp.ne.s32.totalorder %s105, %s108
      %p117 = scmp.eq.s32.totalorder %s18, 1
      %p118 = por %p116, %p117
      %p119 = scmp.ne.s32.totalorder %s108, %s109
      %p120 = scmp.eq.s32.totalorder %s18, 0
      %p121 = por %p119, %p120
      %p122 = scmp.ne.s32.totalorder %s108, %s109
      %p123 = scmp.eq.s32.totalorder %s19, 1
      %p124 = por %p122, %p123
      %p126 = scmp.ne.s32.totalorder %s109, %s125
      %p127 = scmp.eq.s32.totalorder %s19, 0
      %p128 = por %p126, %p127
      %s130 = sadd.s32 %s129, 1
      %p133 = scmp.eq.s32.totalorder %s13, 1
      %p134 = scmp.ne.s32.totalorder %s129, %s131
      %p135 = scmp.eq.s32.totalorder %s13, 0
      %p136 = por %p134, %p135
      %p137 = scmp.ne.s32.totalorder %s129, %s131
      %p138 = scmp.eq.s32.totalorder %s18, 1
      %p139 = por %p137, %p138
      %p140 = scmp.ne.s32.totalorder %s131, %s132
      %p141 = scmp.eq.s32.totalorder %s18, 0
      %p142 = por %p140, %p141
      %p143 = scmp.ne.s32.totalorder %s131, %s132
      %p144 = scmp.eq.s32.totalorder %s19, 1
      %p145 = por %p143, %p144
      %p147 = scmp.ne.s32.totalorder %s132, %s146
      %p148 = scmp.eq.s32.totalorder %s19, 0
      %p149 = por %p147, %p148
      %s151 = sadd.s32 %s150, 1
      %p154 = scmp.eq.s32.totalorder %s13, 1
      %p155 = scmp.ne.s32.totalorder %s150, %s152
      %p156 = scmp.eq.s32.totalorder %s13, 0
      %p157 = por %p155, %p156
      %p158 = scmp.ne.s32.totalorder %s150, %s152
      %p159 = scmp.eq.s32.totalorder %s18, 1
      %p160 = por %p158, %p159
      %p161 = scmp.ne.s32.totalorder %s152, %s153
      %p162 = scmp.eq.s32.totalorder %s18, 0
      %p163 = por %p161, %p162
      %p164 = scmp.ne.s32.totalorder %s152, %s153
      %p165 = scmp.eq.s32.totalorder %s19, 1
      %p166 = por %p164, %p165
      %p168 = scmp.ne.s32.totalorder %s153, %s167
      %p169 = scmp.eq.s32.totalorder %s19, 0
      %p170 = por %p168, %p169
      %s172 = sadd.s32 %s171, 1
      %p175 = scmp.eq.s32.totalorder %s13, 1
      %p176 = scmp.ne.s32.totalorder %s171, %s173
      %p177 = scmp.eq.s32.totalorder %s13, 0
      %p178 = por %p176, %p177
      %p179 = scmp.ne.s32.totalorder %s171, %s173
      %p180 = scmp.eq.s32.totalorder %s18, 1
      %p181 = por %p179, %p180
      %p182 = scmp.ne.s32.totalorder %s173, %s174
      %p183 = scmp.eq.s32.totalorder %s18, 0
      %p184 = por %p182, %p183
      %p185 = scmp.ne.s32.totalorder %s173, %s174
      %p186 = scmp.eq.s32.totalorder %s19, 1
      %p187 = por %p185, %p186
      %p189 = scmp.ne.s32.totalorder %s174, %s188
      %p190 = scmp.eq.s32.totalorder %s19, 0
      %p191 = por %p189, %p190
      %p192 = scmp.le.s32.totalorder 1, %s13
      %p193 = scmp.lt.s32.totalorder %s13, 3
      %p194 = pnand %p192, %p193
      %p195 = pneg %p194
      // Predicated region
      $region9: #{tpu_custom_call.1} parent=5 // pred_check
        _
      $region10: #{tpu_custom_call.1} parent=5 // pred_check_branch
        %197 = sbr.rel (%p194) target = $region12
      $region11: #{tpu_custom_call.1} parent=5 // pred_region
        %s198 = ssub.s32 %s13, 1
        // Predicated region
        $region13: #{tpu_custom_call.1} parent=11 // pred_check
          %p199 = pneg %p53
        $region14: #{tpu_custom_call.1} parent=11 // pred_check_branch
          %201 = sbr.rel (%p199) target = $region16
        $region15: #{tpu_custom_call.1} parent=11 // pred_region
          _
        $region16: #{tpu_custom_call.1} parent=11 // pred_fallthru
          _
        // Predicated region
        $region17: #{tpu_custom_call.1} parent=11 // pred_check
          %p202 = pneg %p74
        $region18: #{tpu_custom_call.1} parent=11 // pred_check_branch
          %204 = sbr.rel (%p202) target = $region20
        $region19: #{tpu_custom_call.1} parent=11 // pred_region
          _
        $region20: #{tpu_custom_call.1} parent=11 // pred_fallthru
          _
        // Predicated region
        $region21: #{tpu_custom_call.1} parent=11 // pred_check
          %p205 = pneg %p95
        $region22: #{tpu_custom_call.1} parent=11 // pred_check_branch
          %207 = sbr.rel (%p205) target = $region24
        $region23: #{tpu_custom_call.1} parent=11 // pred_region
          _
        $region24: #{tpu_custom_call.1} parent=11 // pred_fallthru
          _
        // Predicated region
        $region25: #{tpu_custom_call.1} parent=11 // pred_check
          %p208 = pneg %p121
        $region26: #{tpu_custom_call.1} parent=11 // pred_check_branch
          %210 = sbr.rel (%p208) target = $region28
        $region27: #{tpu_custom_call.1} parent=11 // pred_region
          %p211 = scmp.lt.s32.totalorder %s24, 0
          %s212 = scalar_select %p211, %s24, 0
          %s213 = smul.addr %s212, 2
          %s214 = scalar_lea.vmem %s3, %s213
        $region28: #{tpu_custom_call.1} parent=11 // pred_fallthru
          _
        // Predicated region
        $region29: #{tpu_custom_call.1} parent=11 // pred_check
          %p215 = pneg %p142
        $region30: #{tpu_custom_call.1} parent=11 // pred_check_branch
          %217 = sbr.rel (%p215) target = $region32
        $region31: #{tpu_custom_call.1} parent=11 // pred_region
          _
        $region32: #{tpu_custom_call.1} parent=11 // pred_fallthru
          _
        // Predicated region
        $region33: #{tpu_custom_call.1} parent=11 // pred_check
          %p218 = pneg %p163
        $region34: #{tpu_custom_call.1} parent=11 // pred_check_branch
          %220 = sbr.rel (%p218) target = $region36
        $region35: #{tpu_custom_call.1} parent=11 // pred_region
          _
        $region36: #{tpu_custom_call.1} parent=11 // pred_fallthru
          _
      $region12: #{tpu_custom_call.1} parent=5 // pred_fallthru
        _
      %p221 = scmp.lt.s32.totalorder %s13, 2
      // Predicated region
      $region37: #{tpu_custom_call.1} parent=5 // pred_check
        %p222 = pneg %p221
      $region38: #{tpu_custom_call.1} parent=5 // pred_check_branch
        %224 = sbr.rel (%p222) target = $region40
      $region39: #{tpu_custom_call.1} parent=5 // pred_region
        _
      $region40: #{tpu_custom_call.1} parent=5 // pred_fallthru
        _
      %p225 = scmp.le.s32.totalorder 1, %s13
      %p226 = scmp.lt.s32.totalorder %s13, 3
      %p227 = pnand %p225, %p226
      %p228 = pneg %p227
      // Predicated region
      $region41: #{tpu_custom_call.1} parent=5 // pred_check
        _
      $region42: #{tpu_custom_call.1} parent=5 // pred_check_branch
        %230 = sbr.rel (%p227) target = $region44
      $region43: #{tpu_custom_call.1} parent=5 // pred_region
        %s231 = ssub.s32 %s13, 1
        %p232 = pneg %p53
        %p233 = pneg %p50
        %p234 = pneg %p74
        %p235 = pneg %p71
        %p236 = pneg %p95
        %p237 = pneg %p92
        %p238 = scmp.lt.s32.totalorder %s24, 0
        %s239 = scalar_select %p238, %s24, 0
        %s240 = smul.addr %s239, 2
        %s241 = scalar_lea.vmem %s3, %s240
        %p242 = pneg %p121
        %p243 = pneg %p118
        %p244 = pneg %p142
        %p245 = pneg %p139
        %p246 = pneg %p163
        %p247 = pneg %p160
        %p248 = pneg %p184
        %p249 = pneg %p181
        %p250 = scmp.lt.s32.totalorder %s24, 0
        %s251 = scalar_select %p250, %s24, 0
        %s252 = smul.addr %s251, 2
        %s253 = scalar_lea.vmem %s3, %s252
        %p254 = scmp.eq.s32.totalorder %s23, 1
        %p255 = scmp.eq.s32.totalorder %s25, 0
        %s256 = smul.u32 %s24, 16
        %s257 = smul.u32 %s25, 16
        %p258 = scmp.eq.s32.totalorder %s23, 0
        %p259 = scmp.eq.s32.totalorder %s24, 0
        %p260 = pnand %p258, %p259
        %p261 = pneg %p260
        %p262 = pnand %p261, %p255
        %p263 = pneg %p262
        // Predicated region
        $region45: #{tpu_custom_call.1} parent=43 // pred_check
          _
        $region46: #{tpu_custom_call.1} parent=43 // pred_check_branch
          %265 = sbr.rel (%p262) target = $region48
        $region47: #{tpu_custom_call.1} parent=43 // pred_region
          %v266 = vld [vmem:[%s1] sm:$0xff]
          %v267 = vld [vmem:[%s1 + $0x8] sm:$0xff]
          %vm268 = vcmask 261120
          %269 = vst.msk [vmem:[#allocation2] sm:$0xff] %vm268, %v266
          %270 = vst.msk [vmem:[#allocation2 + $0x8] sm:$0xff] %vm268, %v267
          %vm271 = vcmask 254976
          %272 = vst.msk [vmem:[#allocation5] sm:$0x3] %vm271, 0.0
        $region48: #{tpu_custom_call.1} parent=43 // pred_fallthru
          _
        // Predicated region
        $region49: #{tpu_custom_call.1} parent=43 // pred_check
          %p273 = pneg %p255
        $region50: #{tpu_custom_call.1} parent=43 // pred_check_branch
          %275 = sbr.rel (%p273) target = $region52
        $region51: #{tpu_custom_call.1} parent=43 // pred_region
          %vm276 = vcmask 261120
          %277 = vst.msk [vmem:[#allocation4] sm:$0xff] %vm276, 0.0
          %278 = vst.msk [vmem:[#allocation4 + $0x8] sm:$0xff] %vm276, 0.0
        $region52: #{tpu_custom_call.1} parent=43 // pred_fallthru
          _
        %s279 = scalar_lea.vmem %s0, %s256
        %v280 = vld [vmem:[%s279] sm:$0xff]
        %v281 = vld [vmem:[%s279 + $0x8] sm:$0xff]
        %p282 = scmp.lt.s32.totalorder %s23, 0
        %s283 = ssub.s32 0, %s23
        %s284 = scalar_select %p282, %s283, %s23
        %s285 = sand.u32 %s284, 1
        %s286 = ssub.s32 0, %s285
        %s287 = scalar_select %p282, %s286, %s285
        %p288 = scmp.ne.s32.totalorder %s287, 0
        %p289 = scmp.lt.s32.totalorder %s287, 0
        %p290 = pnand %p289, %p288
        %p291 = pneg %p290
        %s292 = sadd.s32 %s287, 2
        %s293 = scalar_select %p291, %s292, %s287
        %p294 = scmp.eq.s32.totalorder %s293, 0
        // Predicated region
        $region53: #{tpu_custom_call.1} parent=43 // pred_check
          %p295 = pneg %p294
        $region54: #{tpu_custom_call.1} parent=43 // pred_check_branch
          %297 = sbr.rel (%p295) target = $region56
        $region55: #{tpu_custom_call.1} parent=43 // pred_region
          %v298 = vld [vmem:[#allocation4] sm:$0xff]
          %v299 = vld [vmem:[#allocation4 + $0x8] sm:$0xff]
          %s300 = scalar_lea.vmem [#allocation2], %s257
          %v301 = vld [vmem:[%s300] sm:$0xff]
          %v302 = vld [vmem:[%s300 + $0x8] sm:$0xff]
          %vm303 = vcmask 130048
          %v305 = vsel %vm303, %v280, 0
          %v308 = vsel %vm303, %v281, 0
          %310 = vmatprep.subr.mxu0 0.0
          %311 = vmatpush1.msra.mxu0 0.0
          %312 = vmatprep.subr.mxu0 0.0
          %313 = vmatpush1.msra.mxu0 0.0
          %314 = vmatprep.subr.mxu0 0.0
          %315 = vmatpush1.msra.mxu0 0.0
          %316 = vmatprep.subr.mxu0 0.0
          %317 = vmatpush1.msra.mxu0 0.0
          %318 = vmatprep.subr.mxu0 0.0
          %319 = vmatpush1.msra.mxu0 0.0
          %320 = vmatprep.subr.mxu0 0.0
          %321 = vmatpush1.msra.mxu0 0.0
          %322 = vmatprep.subr.mxu0 0.0
          %323 = vmatpush1.msra.mxu0 0.0
          %324 = vmatprep.subr.mxu0 0.0
          %325 = vmatpush1.msra.mxu0 0.0
          %326 = vmatprep.subr.mxu0 0.0
          %327 = vmatpush1.msra.mxu0 0.0
          %328 = vmatprep.subr.mxu0 0.0
          %329 = vmatpush1.msra.mxu0 0.0
          %330 = vmatprep.subr.mxu0 0.0
          %331 = vmatpush1.msra.mxu0 0.0
          %332 = vmatprep.subr.mxu0 0.0
          %333 = vmatpush1.msra.mxu0 0.0
          %334 = vmatprep.subr.mxu0 0.0
          %335 = vmatpush1.msra.mxu0 0.0
          %336 = vmatprep.subr.mxu0 0.0
          %337 = vmatpush1.msra.mxu0 0.0
          %338 = vmatprep.subr.mxu0 0.0
          %339 = vmatpush1.msra.mxu0 %v302
          %340 = vmatprep.subr.mxu0 0.0
          %341 = vmatpush1.msra.mxu0 %v301
          %342 = vmatprep.subr.mxu0 0.0
          %343 = vmatpush2.msra.mxu0 0.0
          %344 = vmatprep.subr.mxu0 0.0
          %345 = vmatpush2.msra.mxu0 0.0
          %346 = vmatprep.subr.mxu0 0.0
          %347 = vmatpush2.msra.mxu0 0.0
          %348 = vmatprep.subr.mxu0 0.0
          %349 = vmatpush2.msra.mxu0 0.0
          %350 = vmatprep.subr.mxu0 0.0
          %351 = vmatpush2.msra.mxu0 0.0
          %352 = vmatprep.subr.mxu0 0.0
          %353 = vmatpush2.msra.mxu0 0.0
          %354 = vmatprep.subr.mxu0 0.0
          %355 = vmatpush2.msra.mxu0 0.0
          %356 = vmatprep.subr.mxu0 0.0
          %357 = vmatpush2.msra.mxu0 0.0
          %358 = vmatprep.subr.mxu0 0.0
          %359 = vmatpush2.msra.mxu0 0.0
          %360 = vmatprep.subr.mxu0 0.0
          %361 = vmatpush2.msra.mxu0 0.0
          %362 = vmatprep.subr.mxu0 0.0
          %363 = vmatpush2.msra.mxu0 0.0
          %364 = vmatprep.subr.mxu0 0.0
          %365 = vmatpush2.msra.mxu0 0.0
          %366 = vmatprep.subr.mxu0 0.0
          %367 = vmatpush2.msra.mxu0 0.0
          %368 = vmatprep.subr.mxu0 0.0
          %369 = vmatpush2.msra.mxu0 0.0
          %370 = vmatprep.subr.mxu0 0.0
          %371 = vmatpush2.msra.mxu0 0.0
          %372 = vmatprep.subr.mxu0 0.0
          %373 = vmatpush2.msra.mxu0 0.0
          %374 = vmatprep.mubr.f32.mxu0 0.0
          %375 = vmatmul.mubr.f32.gmra.mxu0 %v305
          %v376 = vpop.f32.mrf.mxu0
          %v377 = vadd.f32 0.0, %v376
          %v378 = vpop.f32.mrf.mxu0
          %379 = vmatprep.mubr.f32.mxu0 0.0
          %380 = vmatmul.mubr.f32.gmra.mxu0 %v308
          %v381 = vpop.f32.mrf.mxu0
          %v382 = vadd.f32 0.0, %v381
          %v383 = vpop.f32.mrf.mxu0
          %384 = vdwg.mxu0
          %v385 = vadd.f32 %v298, %v377
          %v386 = vadd.f32 %v299, %v382
          %vm387 = vcmask 261120
          %388 = vst.msk [vmem:[#allocation4] sm:$0xff] %vm387, %v385
          %389 = vst.msk [vmem:[#allocation4 + $0x8] sm:$0xff] %vm387, %v386
        $region56: #{tpu_custom_call.1} parent=43 // pred_fallthru
          _
        %p390 = scmp.eq.s32.totalorder %s293, 1
        // Predicated region
        $region57: #{tpu_custom_call.1} parent=43 // pred_check
          %p391 = pneg %p390
        $region58: #{tpu_custom_call.1} parent=43 // pred_check_branch
          %393 = sbr.rel (%p391) target = $region60
        $region59: #{tpu_custom_call.1} parent=43 // pred_region
          %v394 = vld [vmem:[#allocation4] sm:$0xff]
          %v395 = vld [vmem:[#allocation4 + $0x8] sm:$0xff]
          %s396 = scalar_lea.vmem [#allocation3], %s257
          %v397 = vld [vmem:[%s396] sm:$0xff]
          %v398 = vld [vmem:[%s396 + $0x8] sm:$0xff]
          %vm399 = vcmask 130048
          %v401 = vsel %vm399, %v280, 0
          %v404 = vsel %vm399, %v281, 0
          %406 = vmatprep.subr.mxu0 0.0
          %407 = vmatpush1.msra.mxu0 0.0
          %408 = vmatprep.subr.mxu0 0.0
          %409 = vmatpush1.msra.mxu0 0.0
          %410 = vmatprep.subr.mxu0 0.0
          %411 = vmatpush1.msra.mxu0 0.0
          %412 = vmatprep.subr.mxu0 0.0
          %413 = vmatpush1.msra.mxu0 0.0
          %414 = vmatprep.subr.mxu0 0.0
          %415 = vmatpush1.msra.mxu0 0.0
          %416 = vmatprep.subr.mxu0 0.0
          %417 = vmatpush1.msra.mxu0 0.0
          %418 = vmatprep.subr.mxu0 0.0
          %419 = vmatpush1.msra.mxu0 0.0
          %420 = vmatprep.subr.mxu0 0.0
          %421 = vmatpush1.msra.mxu0 0.0
          %422 = vmatprep.subr.mxu0 0.0
          %423 = vmatpush1.msra.mxu0 0.0
          %424 = vmatprep.subr.mxu0 0.0
          %425 = vmatpush1.msra.mxu0 0.0
          %426 = vmatprep.subr.mxu0 0.0
          %427 = vmatpush1.msra.mxu0 0.0
          %428 = vmatprep.subr.mxu0 0.0
          %429 = vmatpush1.msra.mxu0 0.0
          %430 = vmatprep.subr.mxu0 0.0
          %431 = vmatpush1.msra.mxu0 0.0
          %432 = vmatprep.subr.mxu0 0.0
          %433 = vmatpush1.msra.mxu0 0.0
          %434 = vmatprep.subr.mxu0 0.0
          %435 = vmatpush1.msra.mxu0 %v398
          %436 = vmatprep.subr.mxu0 0.0
          %437 = vmatpush1.msra.mxu0 %v397
          %438 = vmatprep.subr.mxu0 0.0
          %439 = vmatpush2.msra.mxu0 0.0
          %440 = vmatprep.subr.mxu0 0.0
          %441 = vmatpush2.msra.mxu0 0.0
          %442 = vmatprep.subr.mxu0 0.0
          %443 = vmatpush2.msra.mxu0 0.0
          %444 = vmatprep.subr.mxu0 0.0
          %445 = vmatpush2.msra.mxu0 0.0
          %446 = vmatprep.subr.mxu0 0.0
          %447 = vmatpush2.msra.mxu0 0.0
          %448 = vmatprep.subr.mxu0 0.0
          %449 = vmatpush2.msra.mxu0 0.0
          %450 = vmatprep.subr.mxu0 0.0
          %451 = vmatpush2.msra.mxu0 0.0
          %452 = vmatprep.subr.mxu0 0.0
          %453 = vmatpush2.msra.mxu0 0.0
          %454 = vmatprep.subr.mxu0 0.0
          %455 = vmatpush2.msra.mxu0 0.0
          %456 = vmatprep.subr.mxu0 0.0
          %457 = vmatpush2.msra.mxu0 0.0
          %458 = vmatprep.subr.mxu0 0.0
          %459 = vmatpush2.msra.mxu0 0.0
          %460 = vmatprep.subr.mxu0 0.0
          %461 = vmatpush2.msra.mxu0 0.0
          %462 = vmatprep.subr.mxu0 0.0
          %463 = vmatpush2.msra.mxu0 0.0
          %464 = vmatprep.subr.mxu0 0.0
          %465 = vmatpush2.msra.mxu0 0.0
          %466 = vmatprep.subr.mxu0 0.0
          %467 = vmatpush2.msra.mxu0 0.0
          %468 = vmatprep.subr.mxu0 0.0
          %469 = vmatpush2.msra.mxu0 0.0
          %470 = vmatprep.mubr.f32.mxu0 0.0
          %471 = vmatmul.mubr.f32.gmra.mxu0 %v401
          %v472 = vpop.f32.mrf.mxu0
          %v473 = vadd.f32 0.0, %v472
          %v474 = vpop.f32.mrf.mxu0
          %475 = vmatprep.mubr.f32.mxu0 0.0
          %476 = vmatmul.mubr.f32.gmra.mxu0 %v404
          %v477 = vpop.f32.mrf.mxu0
          %v478 = vadd.f32 0.0, %v477
          %v479 = vpop.f32.mrf.mxu0
          %480 = vdwg.mxu0
          %v481 = vadd.f32 %v394, %v473
          %v482 = vadd.f32 %v395, %v478
          %vm483 = vcmask 261120
          %484 = vst.msk [vmem:[#allocation4] sm:$0xff] %vm483, %v481
          %485 = vst.msk [vmem:[#allocation4 + $0x8] sm:$0xff] %vm483, %v482
        $region60: #{tpu_custom_call.1} parent=43 // pred_fallthru
          _
        %p486 = scmp.ne.s32.totalorder %s23, 1
        %p487 = pnand %p255, %p486
        %p488 = pneg %p487
        %p489 = pnand %p488, %p294
        %p490 = pneg %p489
        // Predicated region
        $region61: #{tpu_custom_call.1} parent=43 // pred_check
          _
        $region62: #{tpu_custom_call.1} parent=43 // pred_check_branch
          %492 = sbr.rel (%p489) target = $region64
        $region63: #{tpu_custom_call.1} parent=43 // pred_region
          %v493 = vld [vmem:[#allocation4] sm:$0xff]
          %v494 = vld [vmem:[#allocation4 + $0x8] sm:$0xff]
          %s495 = scalar_lea.vmem [#allocation3], %s256
          %vm496 = vcmask 261120
          %497 = vst.msk [vmem:[%s495] sm:$0xff] %vm496, %v493
          %498 = vst.msk [vmem:[%s495 + $0x8] sm:$0xff] %vm496, %v494
        $region64: #{tpu_custom_call.1} parent=43 // pred_fallthru
          _
        %p499 = pnand %p488, %p390
        %p500 = pneg %p499
        // Predicated region
        $region65: #{tpu_custom_call.1} parent=43 // pred_check
          _
        $region66: #{tpu_custom_call.1} parent=43 // pred_check_branch
          %502 = sbr.rel (%p499) target = $region68
        $region67: #{tpu_custom_call.1} parent=43 // pred_region
          %v503 = vld [vmem:[#allocation4] sm:$0xff]
          %v504 = vld [vmem:[#allocation4 + $0x8] sm:$0xff]
          %s505 = scalar_lea.vmem [#allocation2], %s256
          %vm506 = vcmask 261120
          %507 = vst.msk [vmem:[%s505] sm:$0xff] %vm506, %v503
          %508 = vst.msk [vmem:[%s505 + $0x8] sm:$0xff] %vm506, %v504
        $region68: #{tpu_custom_call.1} parent=43 // pred_fallthru
          _
        %p509 = pnand %p255, %p254
        %p510 = pneg %p509
        // Predicated region
        $region69: #{tpu_custom_call.1} parent=43 // pred_check
          _
        $region70: #{tpu_custom_call.1} parent=43 // pred_check_branch
          %512 = sbr.rel (%p509) target = $region72
        $region71: #{tpu_custom_call.1} parent=43 // pred_region
          %v513 = vld [vmem:[#allocation4] sm:$0xff]
          %v514 = vld [vmem:[#allocation4 + $0x8] sm:$0xff]
          %v515 = vld [vmem:[%s2] sm:$0x1]
          %v517 = vlaneseq
          %v518 = vshrl.u32 %v517, 7
          %v519 = vsub.s32 0, %v518
          %v520 = vrot.slane %v515, %v519
          %v522 = vadd.f32 %v513, %v520
          %v523 = vadd.f32 %v514, %v520
          %vm524 = vcmask 261120
          %v525 = vsel %vm524, %v522, -inf
          %526 = vmax.xlane.f32.xlu0 %v525
          %v527 = vpop.xlane.xlu0 %526
          %v528 = vsel %vm524, %v523, -inf
          %529 = vmax.xlane.f32.xlu0 %v528
          %v530 = vpop.xlane.xlu0 %529
          %v531 = vsub.f32 %v522, %v527
          %v532 = vsub.f32 %v523, %v530
          %v533 = vmul.f32 %v531, 1.442695
          %v534 = vpow.pop %v533
          %v535 = vmul.f32 %v532, 1.442695
          %v536 = vpow.pop %v535
          %v537 = vsel %vm524, %v534, 0.0
          %538 = vadd.xlane.f32.xlu0 %v537
          %v539 = vpop.xlane.xlu0 %538
          %v540 = vsel %vm524, %v536, 0.0
          %541 = vadd.xlane.f32.xlu0 %v540
          %v542 = vpop.xlane.xlu0 %541
          %v543 = vrcp.pop %v539
          %v544 = vmul.f32 %v534, %v543
          %v545 = vrcp.pop %v542
          %v546 = vmul.f32 %v536, %v545
          %v547 = vld [vmem:[#allocation5] sm:$0x3]
          %v548 = vld [vmem:[%s253] sm:$0x3]
          %vm549 = vcmask 130048
          %v551 = vsel %vm549, %v548, 0
          %553 = vmatprep.subr.mxu0 0.0
          %554 = vmatpush1.msra.mxu0 0.0
          %555 = vmatprep.subr.mxu0 0.0
          %556 = vmatpush1.msra.mxu0 0.0
          %557 = vmatprep.subr.mxu0 0.0
          %558 = vmatpush1.msra.mxu0 0.0
          %559 = vmatprep.subr.mxu0 0.0
          %560 = vmatpush1.msra.mxu0 0.0
          %561 = vmatprep.subr.mxu0 0.0
          %562 = vmatpush1.msra.mxu0 0.0
          %563 = vmatprep.subr.mxu0 0.0
          %564 = vmatpush1.msra.mxu0 0.0
          %565 = vmatprep.subr.mxu0 0.0
          %566 = vmatpush1.msra.mxu0 0.0
          %567 = vmatprep.subr.mxu0 0.0
          %568 = vmatpush1.msra.mxu0 0.0
          %569 = vmatprep.subr.mxu0 0.0
          %570 = vmatpush1.msra.mxu0 0.0
          %571 = vmatprep.subr.mxu0 0.0
          %572 = vmatpush1.msra.mxu0 0.0
          %573 = vmatprep.subr.mxu0 0.0
          %574 = vmatpush1.msra.mxu0 0.0
          %575 = vmatprep.subr.mxu0 0.0
          %576 = vmatpush1.msra.mxu0 0.0
          %577 = vmatprep.subr.mxu0 0.0
          %578 = vmatpush1.msra.mxu0 0.0
          %579 = vmatprep.subr.mxu0 0.0
          %580 = vmatpush1.msra.mxu0 0.0
          %581 = vmatprep.subr.mxu0 0.0
          %582 = vmatpush1.msra.mxu0 %v546
          %583 = vmatprep.subr.mxu0 0.0
          %584 = vmatpush1.msra.mxu0 %v544
          %585 = vmatprep.subr.mxu0 0.0
          %586 = vmatpush2.msra.mxu0 0.0
          %587 = vmatprep.subr.mxu0 0.0
          %588 = vmatpush2.msra.mxu0 0.0
          %589 = vmatprep.subr.mxu0 0.0
          %590 = vmatpush2.msra.mxu0 0.0
          %591 = vmatprep.subr.mxu0 0.0
          %592 = vmatpush2.msra.mxu0 0.0
          %593 = vmatprep.subr.mxu0 0.0
          %594 = vmatpush2.msra.mxu0 0.0
          %595 = vmatprep.subr.mxu0 0.0
          %596 = vmatpush2.msra.mxu0 0.0
          %597 = vmatprep.subr.mxu0 0.0
          %598 = vmatpush2.msra.mxu0 0.0
          %599 = vmatprep.subr.mxu0 0.0
          %600 = vmatpush2.msra.mxu0 0.0
          %601 = vmatprep.subr.mxu0 0.0
          %602 = vmatpush2.msra.mxu0 0.0
          %603 = vmatprep.subr.mxu0 0.0
          %604 = vmatpush2.msra.mxu0 0.0
          %605 = vmatprep.subr.mxu0 0.0
          %606 = vmatpush2.msra.mxu0 0.0
          %607 = vmatprep.subr.mxu0 0.0
          %608 = vmatpush2.msra.mxu0 0.0
          %609 = vmatprep.subr.mxu0 0.0
          %610 = vmatpush2.msra.mxu0 0.0
          %611 = vmatprep.subr.mxu0 0.0
          %612 = vmatpush2.msra.mxu0 0.0
          %613 = vmatprep.subr.mxu0 0.0
          %614 = vmatpush2.msra.mxu0 0.0
          %615 = vmatprep.subr.mxu0 0.0
          %616 = vmatpush2.msra.mxu0 0.0
          %617 = vmatprep.mubr.f32.mxu0 0.0
          %618 = vmatmul.mubr.f32.gmra.mxu0 %v551
          %v619 = vpop.f32.mrf.mxu0
          %v620 = vadd.f32 0.0, %v619
          %v621 = vpop.f32.mrf.mxu0
          %622 = vdwg.mxu0
          %v623 = vadd.f32 %v547, %v620
          %vm624 = vcmask 254976
          %625 = vst.msk [vmem:[#allocation5] sm:$0x3] %vm624, %v623
        $region72: #{tpu_custom_call.1} parent=43 // pred_fallthru
          _
        %p626 = pnand %p510, %p259
        %p627 = pneg %p626
        // Predicated region
        $region73: #{tpu_custom_call.1} parent=43 // pred_check
          _
        $region74: #{tpu_custom_call.1} parent=43 // pred_check_branch
          %629 = sbr.rel (%p626) target = $region76
        $region75: #{tpu_custom_call.1} parent=43 // pred_region
          %v630 = vld [vmem:[#allocation5] sm:$0x3]
          %v631 = vld [vmem:[%s4] sm:$0xff]
          %v632 = vld [vmem:[%s4 + $0x8] sm:$0xff]
          %v633 = vld [vmem:[%s4 + $0x10] sm:$0xff]
          %v634 = vld [vmem:[%s4 + $0x18] sm:$0xff]
          %v635 = vld [vmem:[%s5] sm:$0x1]
          %v637 = vlaneseq
          %v638 = vshrl.u32 %v637, 7
          %v639 = vsub.s32 0, %v638
          %v640 = vrot.slane %v635, %v639
          %vm642 = vcmask 261120
          %v644 = vsel %vm642, %v630, 0
          %646 = vmatprep.subr.mxu0 0.0
          %647 = vmatpush1.msra.mxu0 0.0
          %648 = vmatprep.subr.mxu0 0.0
          %649 = vmatpush1.msra.mxu0 0.0
          %650 = vmatprep.subr.mxu0 0.0
          %651 = vmatpush1.msra.mxu0 0.0
          %652 = vmatprep.subr.mxu0 0.0
          %653 = vmatpush1.msra.mxu0 0.0
          %654 = vmatprep.subr.mxu0 0.0
          %655 = vmatpush1.msra.mxu0 0.0
          %656 = vmatprep.subr.mxu0 0.0
          %657 = vmatpush1.msra.mxu0 0.0
          %658 = vmatprep.subr.mxu0 0.0
          %659 = vmatpush1.msra.mxu0 0.0
          %660 = vmatprep.subr.mxu0 0.0
          %661 = vmatpush1.msra.mxu0 0.0
          %662 = vmatprep.subr.mxu0 0.0
          %663 = vmatpush1.msra.mxu0 0.0
          %664 = vmatprep.subr.mxu0 0.0
          %665 = vmatpush1.msra.mxu0 0.0
          %666 = vmatprep.subr.mxu0 0.0
          %667 = vmatpush1.msra.mxu0 0.0
          %668 = vmatprep.subr.mxu0 0.0
          %669 = vmatpush1.msra.mxu0 0.0
          %670 = vmatprep.subr.mxu0 0.0
          %671 = vmatpush1.msra.mxu0 %v634
          %672 = vmatprep.subr.mxu0 0.0
          %673 = vmatpush1.msra.mxu0 %v633
          %674 = vmatprep.subr.mxu0 0.0
          %675 = vmatpush1.msra.mxu0 %v632
          %676 = vmatprep.subr.mxu0 0.0
          %677 = vmatpush1.msra.mxu0 %v631
          %678 = vmatprep.subr.mxu0 0.0
          %679 = vmatpush2.msra.mxu0 0.0
          %680 = vmatprep.subr.mxu0 0.0
          %681 = vmatpush2.msra.mxu0 0.0
          %682 = vmatprep.subr.mxu0 0.0
          %683 = vmatpush2.msra.mxu0 0.0
          %684 = vmatprep.subr.mxu0 0.0
          %685 = vmatpush2.msra.mxu0 0.0
          %686 = vmatprep.subr.mxu0 0.0
          %687 = vmatpush2.msra.mxu0 0.0
          %688 = vmatprep.subr.mxu0 0.0
          %689 = vmatpush2.msra.mxu0 0.0
          %690 = vmatprep.subr.mxu0 0.0
          %691 = vmatpush2.msra.mxu0 0.0
          %692 = vmatprep.subr.mxu0 0.0
          %693 = vmatpush2.msra.mxu0 0.0
          %694 = vmatprep.subr.mxu0 0.0
          %695 = vmatpush2.msra.mxu0 0.0
          %696 = vmatprep.subr.mxu0 0.0
          %697 = vmatpush2.msra.mxu0 0.0
          %698 = vmatprep.subr.mxu0 0.0
          %699 = vmatpush2.msra.mxu0 0.0
          %700 = vmatprep.subr.mxu0 0.0
          %701 = vmatpush2.msra.mxu0 0.0
          %702 = vmatprep.subr.mxu0 0.0
          %703 = vmatpush2.msra.mxu0 0.0
          %704 = vmatprep.subr.mxu0 0.0
          %705 = vmatpush2.msra.mxu0 0.0
          %706 = vmatprep.subr.mxu0 0.0
          %707 = vmatpush2.msra.mxu0 0.0
          %708 = vmatprep.subr.mxu0 0.0
          %709 = vmatpush2.msra.mxu0 0.0
          %710 = vmatprep.mubr.f32.mxu0 0.0
          %711 = vmatmul.mubr.f32.gmra.mxu0 %v644
          %v712 = vpop.f32.mrf.mxu0
          %v713 = vadd.f32 %v640, %v712
          %v714 = vpop.f32.mrf.mxu0
          %715 = vdwg.mxu0
          %vm716 = vcmask 17408
          %v717 = vsel %vm716, %v713, -inf
          %718 = vmax.xlane.f32.xlu0 %v717
          %v719 = vpop.xlane.xlu0 %718
          %v720 = vsub.f32 %v713, %v719
          %v721 = vmul.f32 %v720, 1.442695
          %v722 = vpow.pop %v721
          %v723 = vsel %vm716, %v722, 0.0
          %724 = vadd.xlane.f32.xlu0 %v723
          %v725 = vpop.xlane.xlu0 %724
          %v726 = vrcp.pop %v725
          %v727 = vmul.f32 %v722, %v726
          %728 = vst.msk [vmem:[#allocation6] sm:$0x3] %vm716, %v727
        $region76: #{tpu_custom_call.1} parent=43 // pred_fallthru
          _
        // Predicated region
        $region77: #{tpu_custom_call.1} parent=43 // pred_check
          %p729 = pneg %p181
        $region78: #{tpu_custom_call.1} parent=43 // pred_check_branch
          %731 = sbr.rel (%p729) target = $region80
        $region79: #{tpu_custom_call.1} parent=43 // pred_region
          %s733 = ssub.s32 32, 32
          %734 = vsyncadd [#allocation7], %s733
          %s736 = sshll.u32 [#allocation6], 4
          %s737 = int_to_ptr.vmem [resolvable:$true] %s736
          %739 = dma.vmem_to_hbm [thread:$0]  %s737, 32, %s6, [#allocation7]
        $region80: #{tpu_custom_call.1} parent=43 // pred_fallthru
          _
        // Predicated region
        $region81: #{tpu_custom_call.1} parent=43 // pred_check
          %p740 = pneg %p181
        $region82: #{tpu_custom_call.1} parent=43 // pred_check_branch
          %742 = sbr.rel (%p740) target = $region84
        $region83: #{tpu_custom_call.1} parent=43 // pred_region
          %743 = dma.done [#allocation7], 32
        $region84: #{tpu_custom_call.1} parent=43 // pred_fallthru
          _
      $region44: #{tpu_custom_call.1} parent=5 // pred_fallthru
        _
      %p744 = scmp.le.s32.totalorder 2, %s13
      // Predicated region
      $region85: #{tpu_custom_call.1} parent=5 // pred_check
        %p745 = pneg %p744
      $region86: #{tpu_custom_call.1} parent=5 // pred_check_branch
        %747 = sbr.rel (%p745) target = $region88
      $region87: #{tpu_custom_call.1} parent=5 // pred_region
        %s748 = ssub.s32 %s13, 2
      $region88: #{tpu_custom_call.1} parent=5 // pred_fallthru
        _
    $region6: #{tpu_custom_call.1} parent=1 // loop_footer
      %s17 = sadd.s32 1, %s13
    $region7: #{tpu_custom_call.1} parent=1 // loop_footer_branch
      %12 = sbr.rel target = $region3
    $region8: #{tpu_custom_call.1} parent=1 // loop_exit
      _
    %749 = vsyncpa [#allocation7], 1
    %s750 = scalar_lea.sflag [#allocation7], 1
    %751 = vsyncpa %s750, 1

</llo_original>
